<compile_context>
chip_gen: v6e
topology: v6e:2x2x1
jax: 0.10.0
libtpu: 0.0.40
codegen_flags: <defaults>
</compile_context>

<pallas_src>
import functools

import jax
import jax.numpy as jnp
from jax.experimental import pallas as pl
from jax.experimental.pallas import tpu as pltpu

LANE = 128             # lane width: feature dims padded to multiples of this
SUBLANE = 8            # f32 sublane granularity for the batch (M) dimension
MAX_BATCH_TILE = 512   # rows per grid step at large batch (perf review: 512-1024)
SPLIT_THRESHOLD = 256  # >= this many rows -> split into >=2 grid steps (megacore)
NEG_SLOPE = 0.01       # nn.LeakyReLU() default negative_slope


def _round_up(n, m):
    return ((n + m - 1) // m) * m


def _choose_tiling(batch, max_tile=MAX_BATCH_TILE):
    """Adaptive batch tile: tight for small B, >=2 steps for megacore, capped for large B."""
    b8 = _round_up(max(batch, 1), SUBLANE)
    if b8 <= max_tile:
        n_steps = 2 if b8 >= SPLIT_THRESHOLD else 1
    else:
        n_steps = pl.cdiv(b8, max_tile)
    tile = _round_up(pl.cdiv(b8, n_steps), SUBLANE)
    return tile, n_steps, tile * n_steps


def _fused_mlp_kernel(*refs, flags, fout_pads):
    """refs = (x_ref, w_0 .. w_{L-1}, bias_table_ref, o_ref).

    Chains every Linear(+LeakyReLU) layer on VMEM-resident values; only the
    final activation is written back (no intermediate HBM traffic)."""
    x_ref = refs[0]
    o_ref = refs[-1]
    b_ref = refs[-2]            # (n_layers, max_fout_pad) f32 bias table
    w_refs = refs[1:-2]

    b_all = b_ref[...]          # tiny; load once
    h = x_ref[...]              # (TILE_B, F0_pad) f32
    for i, (leaky, fout) in enumerate(zip(flags, fout_pads)):
        w = w_refs[i][...]                        # (Fin_pad, Fout_pad), f32 or bf16
        b = b_all[i:i + 1, :fout]                 # (1, Fout_pad) f32
        # MXU matmul: operands in the weight dtype (bf16 on the v6e/v7x path),
        # f32 accumulation; bias add + LeakyReLU stay in f32 (v5e-friendly).
        h = jnp.dot(h.astype(w.dtype), w, preferred_element_type=jnp.float32) + b
        if leaky:                                 # static per-layer flag
            h = jnp.maximum(h, NEG_SLOPE * h)     # 2 VALU ops/elem vs 3 for where()
    o_ref[...] = h.astype(o_ref.dtype)


def init_linear_params(key, in_features, out_features):
    """Deterministic init mimicking nn.Linear (uniform in +-1/sqrt(in_features))."""
    kw, kb = jax.random.split(key)
    bound = 1.0 / (in_features ** 0.5)
    w = jax.random.uniform(kw, (out_features, in_features), jnp.float32, -bound, bound)
    b = jax.random.uniform(kb, (out_features,), jnp.float32, -bound, bound)
    return w, b


def init_rna_model_params(key, in_channels, hidden_dims, out_channels):
    params = []
    dims = [in_channels] + list(hidden_dims)
    keys = jax.random.split(key, len(hidden_dims) + 2)
    for i, h in enumerate(hidden_dims):           # encoder: Linear + LeakyReLU
        w, b = init_linear_params(keys[i], dims[i], h)
        params.append(("encoder", w, b, True))
    w1, b1 = init_linear_params(keys[len(hidden_dims)], hidden_dims[-1], 200)
    params.append(("fc1", w1, b1, True))          # fc: Linear(hidden[-1], 200) + LeakyReLU
    w2, b2 = init_linear_params(keys[len(hidden_dims) + 1], 200, out_channels)
    params.append(("fc2", w2, b2, False))         # fc: Linear(200, out)
    return params


def prepare_rna_params(params, matmul_dtype=jnp.float32, keep_last_layer_f32=True):
    """Transpose (out,in)->(in,out), zero-pad all dims to LANE multiples, cast matmul
    weights to `matmul_dtype` (bf16 recommended on v6e/v7x), and pack all biases into
    one (n_layers, max_fout_pad) f32 table (single small resident DMA)."""
    n_layers = len(params)
    ws, raw_bs, flags = [], [], []
    for idx, (_, w, b, leaky) in enumerate(params):
        dout, din = w.shape
        din_p, dout_p = _round_up(din, LANE), _round_up(dout, LANE)
        dt = jnp.float32 if (keep_last_layer_f32 and idx == n_layers - 1) else matmul_dtype
        w_t = jnp.zeros((din_p, dout_p), jnp.float32)
        w_t = w_t.at[:din, :dout].set(jnp.asarray(w, jnp.float32).T)
        ws.append(w_t.astype(dt))
        raw_bs.append(jnp.asarray(b, jnp.float32))
        flags.append(bool(leaky))
    max_fout = max(w.shape[1] for w in ws)
    b_table = jnp.zeros((n_layers, max_fout), jnp.float32)
    for i, b in enumerate(raw_bs):
        b_table = b_table.at[i, :b.shape[0]].set(b)
    return tuple(ws), b_table, tuple(flags)


def build_rna_forward(params, in_channels, out_channels, *,
                      matmul_dtype=jnp.float32, max_batch_tile=MAX_BATCH_TILE):
    """Pad/transpose/cast weights once and return a jitted x -> out forward."""
    ws, b_table, flags = prepare_rna_params(params, matmul_dtype)
    fin_pad = ws[0].shape[0]
    fout_pads = tuple(w.shape[1] for w in ws)
    fout_pad = fout_pads[-1]
    kernel = functools.partial(_fused_mlp_kernel, flags=flags, fout_pads=fout_pads)

    def _forward(x, ws, b_table):
        batch = x.shape[0]
        tile, n_steps, b_pad = _choose_tiling(batch, max_batch_tile)

        # Single fused pad (no materialized zeros + dynamic-update-slice slab):
        # batch only up to the tile multiple, features to the lane multiple.
        # Feature padding MUST remain explicit zeros so padded K lanes times the
        # zero weight rows stay exactly zero (never uninitialized memory).
        x_p = jnp.pad(x.astype(jnp.float32),
                      ((0, b_pad - batch), (0, fin_pad - x.shape[1])))

        in_specs = [pl.BlockSpec((tile, fin_pad), lambda i: (i, 0))]
        for w in ws:
            # Constant index_map -> weights stay VMEM-resident across grid steps.
            # TODO(synk): at large hidden_dims add pipeline_mode=pl.Buffered(1) here
            # to drop the redundant double buffer on these resident weights (v7x VMEM guard).
            in_specs.append(pl.BlockSpec(w.shape, lambda i: (0, 0)))
        in_specs.append(pl.BlockSpec(b_table.shape, lambda i: (0, 0)))

        # Explicit VMEM budget: 2x (double-buffered) weights/bias/io tiles plus
        # activation intermediates + headroom, clamped to [32 MiB, 64 MiB]
        # (within physical VMEM on v5e/v6e's 128 MiB and v7x's 64 MiB).
        w_bytes = sum(w.size * w.dtype.itemsize for w in ws)
        b_bytes = b_table.size * b_table.dtype.itemsize
        io_bytes = tile * (fin_pad + fout_pad) * 4
        act_bytes = 2 * tile * max(fout_pads + (fin_pad,)) * 4
        budget = 2 * (w_bytes + b_bytes + io_bytes) + act_bytes + (4 << 20)
        vmem_limit = int(max(32 << 20, min(budget, 64 << 20)))

        out = pl.pallas_call(
            kernel,
            out_shape=jax.ShapeDtypeStruct((b_pad, fout_pad), jnp.float32),
            grid=(n_steps,),
            in_specs=in_specs,
            out_specs=pl.BlockSpec((tile, fout_pad), lambda i: (i, 0)),
            compiler_params=pltpu.CompilerParams(
                dimension_semantics=("parallel",),
                vmem_limit_bytes=vmem_limit),
        )(x_p, *ws, b_table)
        return out[:batch, :out_channels]

    fwd = jax.jit(_forward)
    return lambda x: fwd(x, ws, b_table)


def _reference_forward(x, params):
    ref = x
    for (_, w, b, leaky) in params:
        ref = jnp.dot(ref, w.T, precision=jax.lax.Precision.HIGHEST) + b
        if leaky:
            ref = jnp.where(ref >= 0, ref, NEG_SLOPE * ref)
    return ref


if __name__ == "__main__":
    # Small shapes consistent with the module's forward:
    batch = 8
    in_channels = 32
    hidden_dims = [64, 48]
    out_channels = 16

    key = jax.random.PRNGKey(0)
    kx, kb, kp = jax.random.split(key, 3)
    x_small = jax.random.normal(kx, (batch, in_channels), dtype=jnp.float32)
    x_big = jax.random.normal(kb, (300, in_channels), dtype=jnp.float32)

    params = init_rna_model_params(kp, in_channels, hidden_dims, out_channels)

    # f32 path (holds the strict 1e-5 tolerance on every TPU generation).
    fwd_f32 = build_rna_forward(params, in_channels, out_channels)
    out_small = jax.block_until_ready(fwd_f32(x_small))
    assert out_small.shape == (batch, out_channels)
    assert jnp.allclose(out_small, _reference_forward(x_small, params),
                        atol=1e-5, rtol=1e-5)

    # Larger batch exercises the multi-step "parallel" grid (megacore split path).
    out_big = jax.block_until_ready(fwd_f32(x_big))
    assert out_big.shape == (300, out_channels)
    assert jnp.allclose(out_big, _reference_forward(x_big, params),
                        atol=1e-5, rtol=1e-5)

    # bf16-MXU path (v6e/v7x recommendation): bf16 weights / f32 accumulate,
    # final layer kept f32; tolerance necessarily looser than 1e-5.
    fwd_bf16 = build_rna_forward(params, in_channels, out_channels,
                                 matmul_dtype=jnp.bfloat16)
    out_bf16 = jax.block_until_ready(fwd_bf16(x_small))
    assert jnp.allclose(out_bf16, _reference_forward(x_small, params),
                        atol=2e-2, rtol=2e-2)

    print("KERNEL_OK")
</pallas_src>

<mosaic_0001>
module attributes {stable_mosaic.version = 11 : i64} {
  func.func @_fused_mlp_kernel(%arg0: i32, %arg1: memref<8x128xf32, #tpu.memory_space<vmem>>, %arg2: memref<128x128xf32, #tpu.memory_space<vmem>>, %arg3: memref<128x128xf32, #tpu.memory_space<vmem>>, %arg4: memref<128x256xf32, #tpu.memory_space<vmem>>, %arg5: memref<256x128xf32, #tpu.memory_space<vmem>>, %arg6: memref<4x256xf32, #tpu.memory_space<vmem>>, %arg7: memref<8x128xf32, #tpu.memory_space<vmem>>) attributes {dimension_semantics = [#tpu.dimension_semantics<parallel>], iteration_bounds = array<i64: 1>, scalar_prefetch = 0 : i64, scratch_operands = 0 : i64, tpu.core_type = #tpu.core_type<tc>, window_params = [{transform_indices = @transform_0, window_bounds = array<i64: 8, 128>}, {pipeline_mode = #tpu.pipeline_mode<synchronous>, transform_indices = @transform_1, window_bounds = array<i64: 128, 128>}, {pipeline_mode = #tpu.pipeline_mode<synchronous>, transform_indices = @transform_2, window_bounds = array<i64: 128, 128>}, {pipeline_mode = #tpu.pipeline_mode<synchronous>, transform_indices = @transform_3, window_bounds = array<i64: 128, 256>}, {pipeline_mode = #tpu.pipeline_mode<synchronous>, transform_indices = @transform_4, window_bounds = array<i64: 256, 128>}, {pipeline_mode = #tpu.pipeline_mode<synchronous>, transform_indices = @transform_5, window_bounds = array<i64: 4, 256>}, {transform_indices = @transform_6, window_bounds = array<i64: 8, 128>}]} {
    %c0 = arith.constant 0 : index
    %c0_0 = arith.constant 0 : index
    %0 = vector.load %arg6[%c0, %c0_0] : memref<4x256xf32, #tpu.memory_space<vmem>>, vector<4x256xf32>
    %c0_1 = arith.constant 0 : index
    %c0_2 = arith.constant 0 : index
    %1 = vector.load %arg1[%c0_1, %c0_2] : memref<8x128xf32, #tpu.memory_space<vmem>>, vector<8x128xf32>
    %c0_3 = arith.constant 0 : index
    %c0_4 = arith.constant 0 : index
    %2 = vector.load %arg2[%c0_3, %c0_4] : memref<128x128xf32, #tpu.memory_space<vmem>>, vector<128x128xf32>
    %3 = vector.extract_strided_slice %0 {offsets = [0, 0], sizes = [1, 128], strides = [1, 1]} : vector<4x256xf32> to vector<1x128xf32>
    %cst = arith.constant dense<0.000000e+00> : vector<8x128xf32>
    %4 = tpu.matmul %1, %2, %cst {dimension_numbers = #tpu.dot_dimension_numbers<[1], [0], [0], [1], [0, 0, 1, 1], [], []>} : vector<8x128xf32>, vector<128x128xf32>, vector<8x128xf32> -> vector<8x128xf32>
    %5 = vector.broadcast %3 : vector<1x128xf32> to vector<8x128xf32>
    %6 = arith.addf %4, %5 : vector<8x128xf32>
    %cst_5 = arith.constant 0.00999999977 : f32
    %7 = vector.broadcast %cst_5 : f32 to vector<8x128xf32>
    %8 = arith.mulf %7, %6 : vector<8x128xf32>
    %9 = arith.maximumf %6, %8 : vector<8x128xf32>
    %c0_6 = arith.constant 0 : index
    %c0_7 = arith.constant 0 : index
    %10 = vector.load %arg3[%c0_6, %c0_7] : memref<128x128xf32, #tpu.memory_space<vmem>>, vector<128x128xf32>
    %11 = vector.extract_strided_slice %0 {offsets = [1, 0], sizes = [1, 128], strides = [1, 1]} : vector<4x256xf32> to vector<1x128xf32>
    %cst_8 = arith.constant dense<0.000000e+00> : vector<8x128xf32>
    %12 = tpu.matmul %9, %10, %cst_8 {dimension_numbers = #tpu.dot_dimension_numbers<[1], [0], [0], [1], [0, 0, 1, 1], [], []>} : vector<8x128xf32>, vector<128x128xf32>, vector<8x128xf32> -> vector<8x128xf32>
    %13 = vector.broadcast %11 : vector<1x128xf32> to vector<8x128xf32>
    %14 = arith.addf %12, %13 : vector<8x128xf32>
    %cst_9 = arith.constant 0.00999999977 : f32
    %15 = vector.broadcast %cst_9 : f32 to vector<8x128xf32>
    %16 = arith.mulf %15, %14 : vector<8x128xf32>
    %17 = arith.maximumf %14, %16 : vector<8x128xf32>
    %c0_10 = arith.constant 0 : index
    %c0_11 = arith.constant 0 : index
    %18 = vector.load %arg4[%c0_10, %c0_11] : memref<128x256xf32, #tpu.memory_space<vmem>>, vector<128x256xf32>
    %19 = vector.extract_strided_slice %0 {offsets = [2, 0], sizes = [1, 256], strides = [1, 1]} : vector<4x256xf32> to vector<1x256xf32>
    %cst_12 = arith.constant dense<0.000000e+00> : vector<8x256xf32>
    %20 = tpu.matmul %17, %18, %cst_12 {dimension_numbers = #tpu.dot_dimension_numbers<[1], [0], [0], [1], [0, 0, 1, 1], [], []>} : vector<8x128xf32>, vector<128x256xf32>, vector<8x256xf32> -> vector<8x256xf32>
    %21 = vector.broadcast %19 : vector<1x256xf32> to vector<8x256xf32>
    %22 = arith.addf %20, %21 : vector<8x256xf32>
    %cst_13 = arith.constant 0.00999999977 : f32
    %23 = vector.broadcast %cst_13 : f32 to vector<8x256xf32>
    %24 = arith.mulf %23, %22 : vector<8x256xf32>
    %25 = arith.maximumf %22, %24 : vector<8x256xf32>
    %c0_14 = arith.constant 0 : index
    %c0_15 = arith.constant 0 : index
    %26 = vector.load %arg5[%c0_14, %c0_15] : memref<256x128xf32, #tpu.memory_space<vmem>>, vector<256x128xf32>
    %27 = vector.extract_strided_slice %0 {offsets = [3, 0], sizes = [1, 128], strides = [1, 1]} : vector<4x256xf32> to vector<1x128xf32>
    %cst_16 = arith.constant dense<0.000000e+00> : vector<8x128xf32>
    %28 = tpu.matmul %25, %26, %cst_16 {dimension_numbers = #tpu.dot_dimension_numbers<[1], [0], [0], [1], [0, 0, 1, 1], [], []>} : vector<8x256xf32>, vector<256x128xf32>, vector<8x128xf32> -> vector<8x128xf32>
    %29 = vector.broadcast %27 : vector<1x128xf32> to vector<8x128xf32>
    %30 = arith.addf %28, %29 : vector<8x128xf32>
    %c0_17 = arith.constant 0 : index
    %c0_18 = arith.constant 0 : index
    %31 = vector.load %arg7[%c0_17, %c0_18] : memref<8x128xf32, #tpu.memory_space<vmem>>, vector<8x128xf32>
    tpu.vector_store %arg7[%c0_17, %c0_18], %30 {strides = array<i32>} : memref<8x128xf32, #tpu.memory_space<vmem>>, vector<8x128xf32>,
    return
  }
  func.func @transform_0(%arg0: i32) -> (i32, i32) {
    %c0_i32 = arith.constant 0 : i32
    %c0_i32_0 = arith.constant 0 : i32
    return %arg0, %c0_i32 : i32, i32
  }
  func.func @transform_1(%arg0: i32) -> (i32, i32) {
    %c0_i32 = arith.constant 0 : i32
    %c0_i32_0 = arith.constant 0 : i32
    %c0_i32_1 = arith.constant 0 : i32
    return %c0_i32, %c0_i32_0 : i32, i32
  }
  func.func @transform_2(%arg0: i32) -> (i32, i32) {
    %c0_i32 = arith.constant 0 : i32
    %c0_i32_0 = arith.constant 0 : i32
    %c0_i32_1 = arith.constant 0 : i32
    return %c0_i32, %c0_i32_0 : i32, i32
  }
  func.func @transform_3(%arg0: i32) -> (i32, i32) {
    %c0_i32 = arith.constant 0 : i32
    %c0_i32_0 = arith.constant 0 : i32
    %c0_i32_1 = arith.constant 0 : i32
    return %c0_i32, %c0_i32_0 : i32, i32
  }
  func.func @transform_4(%arg0: i32) -> (i32, i32) {
    %c0_i32 = arith.constant 0 : i32
    %c0_i32_0 = arith.constant 0 : i32
    %c0_i32_1 = arith.constant 0 : i32
    return %c0_i32, %c0_i32_0 : i32, i32
  }
  func.func @transform_5(%arg0: i32) -> (i32, i32) {
    %c0_i32 = arith.constant 0 : i32
    %c0_i32_0 = arith.constant 0 : i32
    %c0_i32_1 = arith.constant 0 : i32
    return %c0_i32, %c0_i32_0 : i32, i32
  }
  func.func @transform_6(%arg0: i32) -> (i32, i32) {
    %c0_i32 = arith.constant 0 : i32
    %c0_i32_0 = arith.constant 0 : i32
    return %arg0, %c0_i32 : i32, i32
  }
}

</mosaic_0001>

<llo_original>
// kernel: _forward.1
$region0: #{_forward.1}
  #allocation0 [shape = 'u32[]', space=smem, size = 0x4, offset = 0x4, fixed_abs, tag = 'smem constant byte address 0x4 - core index']
  #allocation1 [shape = 'u32[144,128]{1,0:T(1,128)}', space=vmem, size = 0x12000, scoped, tag = 'internal scratch']
  %s0 = inlined_call_operand.vmem [shape: f32[8,128], index: 0, kind: input, shape index: {}]
  %s1 = inlined_call_operand.hbm [shape: f32[128,128], index: 1, kind: input, shape index: {}]
  %s2 = inlined_call_operand.hbm [shape: f32[128,128], index: 2, kind: input, shape index: {}]
  %s3 = inlined_call_operand.hbm [shape: f32[128,256], index: 3, kind: input, shape index: {}]
  %s4 = inlined_call_operand.hbm [shape: f32[256,128], index: 4, kind: input, shape index: {}]
  %s5 = inlined_call_operand.vmem [shape: f32[4,256], index: 5, kind: input, shape index: {}]
  %s6 = inlined_call_operand.hbm [shape: f32[8,128], index: 6, kind: output, shape index: {}]
  %s7 = sld [smem:[#allocation0]]
  $region50: #{_forward.1} parent=0
    _
  %s9 = ssub.s32 1, %s7
  %s10 = scalar_select 0, %s9, %s7
  $region1: #{_forward.1} parent=0
    #allocation2 [shape = 'u8[65536]{0}', space=vmem, size = 0x10000, scoped, tag = 'input window, operand 1, single buffered']
    #allocation3 [shape = 's32[1]{0}', space=sflag, size = 0x4, scoped, tag = 'scoped memory for _forward.1']
    #allocation4 [shape = 's32[1]{0}', space=sflag, size = 0x4, scoped, tag = 'scoped memory for _forward.1']
    #allocation5 [shape = 'u8[65536]{0}', space=vmem, size = 0x10000, scoped, tag = 'input window, operand 2, single buffered']
    #allocation6 [shape = 's32[1]{0}', space=sflag, size = 0x4, scoped, tag = 'scoped memory for _forward.1']
    #allocation7 [shape = 'u8[131072]{0}', space=vmem, size = 0x20000, scoped, tag = 'input window, operand 3, single buffered']
    #allocation8 [shape = 'u8[131072]{0}', space=vmem, size = 0x20000, scoped, tag = 'input window, operand 4, single buffered']
    #allocation9 [shape = 's32[1]{0}', space=sflag, size = 0x4, scoped, tag = 'scoped memory for _forward.1']
    #allocation10 [shape = 'u8[4096]{0}', space=vmem, size = 0x1000, scoped, tag = 'output window, operand 0, single buffered']
    %11 = vsyncpa [#allocation3], 0
    %12 = vsyncpa [#allocation6], 0
    %13 = vsyncpa [#allocation9], 0
    %14 = vsyncpa [#allocation4], 0
    // Predicated region
    $region2: #{_forward.1} parent=1 // pred_check
      _
    $region3: #{_forward.1} parent=1 // pred_check_branch
      %16 = sbr.rel (0) target = $region5
    $region4: #{_forward.1} parent=1 // pred_region
      _
    $region5: #{_forward.1} parent=1 // pred_fallthru
      _
    // Predicated region
    $region6: #{_forward.1} parent=1 // pred_check
      _
    $region7: #{_forward.1} parent=1 // pred_check_branch
      %18 = sbr.rel (0) target = $region9
    $region8: #{_forward.1} parent=1 // pred_region
      %s20 = ssub.s32 2048, 2048
      %21 = vsyncadd [#allocation3], %s20
      %s22 = sshll.u32 [#allocation2], 4
      %s23 = int_to_ptr.vmem [resolvable:$true] %s22
      %28 = dma.hbm_to_vmem [thread:$0]  %s1, 2048, %s23, [#allocation3], 128, 128, 8
    $region9: #{_forward.1} parent=1 // pred_fallthru
      _
    // Predicated region
    $region10: #{_forward.1} parent=1 // pred_check
      _
    $region11: #{_forward.1} parent=1 // pred_check_branch
      %30 = sbr.rel (0) target = $region13
    $region12: #{_forward.1} parent=1 // pred_region
      %s32 = ssub.s32 2048, 2048
      %33 = vsyncadd [#allocation6], %s32
      %s34 = sshll.u32 [#allocation5], 4
      %s35 = int_to_ptr.vmem [resolvable:$true] %s34
      %40 = dma.hbm_to_vmem [thread:$0]  %s2, 2048, %s35, [#allocation6], 128, 128, 8
    $region13: #{_forward.1} parent=1 // pred_fallthru
      _
    // Predicated region
    $region14: #{_forward.1} parent=1 // pred_check
      _
    $region15: #{_forward.1} parent=1 // pred_check_branch
      %42 = sbr.rel (0) target = $region17
    $region16: #{_forward.1} parent=1 // pred_region
      %s44 = ssub.s32 4096, 4096
      %45 = vsyncadd [#allocation6], %s44
      %s46 = sshll.u32 [#allocation7], 4
      %s47 = int_to_ptr.vmem [resolvable:$true] %s46
      %52 = dma.hbm_to_vmem [thread:$0]  %s3, 4096, %s47, [#allocation6], 256, 256, 16
    $region17: #{_forward.1} parent=1 // pred_fallthru
      _
    // Predicated region
    $region18: #{_forward.1} parent=1 // pred_check
      _
    $region19: #{_forward.1} parent=1 // pred_check_branch
      %54 = sbr.rel (0) target = $region21
    $region20: #{_forward.1} parent=1 // pred_region
      %s56 = ssub.s32 4096, 4096
      %57 = vsyncadd [#allocation9], %s56
      %s58 = sshll.u32 [#allocation8], 4
      %s59 = int_to_ptr.vmem [resolvable:$true] %s58
      %64 = dma.hbm_to_vmem [thread:$0]  %s4, 4096, %s59, [#allocation9], 128, 128, 8
    $region21: #{_forward.1} parent=1 // pred_fallthru
      _
    // Predicated region
    $region22: #{_forward.1} parent=1 // pred_check
      _
    $region23: #{_forward.1} parent=1 // pred_check_branch
      %66 = sbr.rel (0) target = $region25
    $region24: #{_forward.1} parent=1 // pred_region
      _
    $region25: #{_forward.1} parent=1 // pred_fallthru
      _
    // Predicated region
    $region26: #{_forward.1} parent=1 // pred_check
      _
    $region27: #{_forward.1} parent=1 // pred_check_branch
      %68 = sbr.rel (0) target = $region29
    $region28: #{_forward.1} parent=1 // pred_region
      %69 = dma.done [#allocation3], 2048
    $region29: #{_forward.1} parent=1 // pred_fallthru
      _
    // Predicated region
    $region30: #{_forward.1} parent=1 // pred_check
      _
    $region31: #{_forward.1} parent=1 // pred_check_branch
      %71 = sbr.rel (0) target = $region33
    $region32: #{_forward.1} parent=1 // pred_region
      %72 = dma.done [#allocation6], 2048
    $region33: #{_forward.1} parent=1 // pred_fallthru
      _
    // Predicated region
    $region34: #{_forward.1} parent=1 // pred_check
      _
    $region35: #{_forward.1} parent=1 // pred_check_branch
      %74 = sbr.rel (0) target = $region37
    $region36: #{_forward.1} parent=1 // pred_region
      %75 = dma.done [#allocation6], 4096
    $region37: #{_forward.1} parent=1 // pred_fallthru
      _
    // Predicated region
    $region38: #{_forward.1} parent=1 // pred_check
      _
    $region39: #{_forward.1} parent=1 // pred_check_branch
      %77 = sbr.rel (0) target = $region41
    $region40: #{_forward.1} parent=1 // pred_region
      %78 = dma.done [#allocation9], 4096
    $region41: #{_forward.1} parent=1 // pred_fallthru
      _
    %v79 = vld [vmem:[%s5] sm:$0xff]
    %v80 = vld [vmem:[%s0] sm:$0xff]
    %v81 = vld [vmem:[#allocation2] sm:$0xff]
    %v82 = vld [vmem:[#allocation2 + $0x8] sm:$0xff]
    %v83 = vld [vmem:[#allocation2 + $0x10] sm:$0xff]
    %v84 = vld [vmem:[#allocation2 + $0x18] sm:$0xff]
    %v85 = vld [vmem:[#allocation2 + $0x20] sm:$0xff]
    %v86 = vld [vmem:[#allocation2 + $0x28] sm:$0xff]
    %v87 = vld [vmem:[#allocation2 + $0x30] sm:$0xff]
    %v88 = vld [vmem:[#allocation2 + $0x38] sm:$0xff]
    %v89 = vld [vmem:[#allocation2 + $0x40] sm:$0xff]
    %v90 = vld [vmem:[#allocation2 + $0x48] sm:$0xff]
    %v91 = vld [vmem:[#allocation2 + $0x50] sm:$0xff]
    %v92 = vld [vmem:[#allocation2 + $0x58] sm:$0xff]
    %v93 = vld [vmem:[#allocation2 + $0x60] sm:$0xff]
    %v94 = vld [vmem:[#allocation2 + $0x68] sm:$0xff]
    %v95 = vld [vmem:[#allocation2 + $0x70] sm:$0xff]
    %v96 = vld [vmem:[#allocation2 + $0x78] sm:$0xff]
    %v97 = vlaneseq
    %v98 = vshrl.u32 %v97, 7
    %v99 = vsub.s32 0, %v98
    %v100 = vrot.slane %v79, %v99
    %101 = vmatprep.subr.mxu0 0.0
    %102 = vmatpush1.msra.mxu0 %v96
    %103 = vmatprep.subr.mxu0 0.0
    %104 = vmatpush1.msra.mxu0 %v95
    %105 = vmatprep.subr.mxu0 0.0
    %106 = vmatpush1.msra.mxu0 %v94
    %107 = vmatprep.subr.mxu0 0.0
    %108 = vmatpush1.msra.mxu0 %v93
    %109 = vmatprep.subr.mxu0 0.0
    %110 = vmatpush1.msra.mxu0 %v92
    %111 = vmatprep.subr.mxu0 0.0
    %112 = vmatpush1.msra.mxu0 %v91
    %113 = vmatprep.subr.mxu0 0.0
    %114 = vmatpush1.msra.mxu0 %v90
    %115 = vmatprep.subr.mxu0 0.0
    %116 = vmatpush1.msra.mxu0 %v89
    %117 = vmatprep.subr.mxu0 0.0
    %118 = vmatpush1.msra.mxu0 %v88
    %119 = vmatprep.subr.mxu0 0.0
    %120 = vmatpush1.msra.mxu0 %v87
    %121 = vmatprep.subr.mxu0 0.0
    %122 = vmatpush1.msra.mxu0 %v86
    %123 = vmatprep.subr.mxu0 0.0
    %124 = vmatpush1.msra.mxu0 %v85
    %125 = vmatprep.subr.mxu0 0.0
    %126 = vmatpush1.msra.mxu0 %v84
    %127 = vmatprep.subr.mxu0 0.0
    %128 = vmatpush1.msra.mxu0 %v83
    %129 = vmatprep.subr.mxu0 0.0
    %130 = vmatpush1.msra.mxu0 %v82
    %131 = vmatprep.subr.mxu0 0.0
    %132 = vmatpush1.msra.mxu0 %v81
    %133 = vmatprep.subr.mxu0 0.0
    %134 = vmatpush2.msra.mxu0 0.0
    %135 = vmatprep.subr.mxu0 0.0
    %136 = vmatpush2.msra.mxu0 0.0
    %137 = vmatprep.subr.mxu0 0.0
    %138 = vmatpush2.msra.mxu0 0.0
    %139 = vmatprep.subr.mxu0 0.0
    %140 = vmatpush2.msra.mxu0 0.0
    %141 = vmatprep.subr.mxu0 0.0
    %142 = vmatpush2.msra.mxu0 0.0
    %143 = vmatprep.subr.mxu0 0.0
    %144 = vmatpush2.msra.mxu0 0.0
    %145 = vmatprep.subr.mxu0 0.0
    %146 = vmatpush2.msra.mxu0 0.0
    %147 = vmatprep.subr.mxu0 0.0
    %148 = vmatpush2.msra.mxu0 0.0
    %149 = vmatprep.subr.mxu0 0.0
    %150 = vmatpush2.msra.mxu0 0.0
    %151 = vmatprep.subr.mxu0 0.0
    %152 = vmatpush2.msra.mxu0 0.0
    %153 = vmatprep.subr.mxu0 0.0
    %154 = vmatpush2.msra.mxu0 0.0
    %155 = vmatprep.subr.mxu0 0.0
    %156 = vmatpush2.msra.mxu0 0.0
    %157 = vmatprep.subr.mxu0 0.0
    %158 = vmatpush2.msra.mxu0 0.0
    %159 = vmatprep.subr.mxu0 0.0
    %160 = vmatpush2.msra.mxu0 0.0
    %161 = vmatprep.subr.mxu0 0.0
    %162 = vmatpush2.msra.mxu0 0.0
    %163 = vmatprep.subr.mxu0 0.0
    %164 = vmatpush2.msra.mxu0 0.0
    %165 = vmatprep.mubr.f32.mxu0 0.0
    %166 = vmatmul.mubr.f32.gmra.mxu0 %v80
    %v167 = vpop.f32.mrf.mxu0
    %v168 = vadd.f32 %v100, %v167
    %v169 = vpop.f32.mrf.mxu0
    %170 = vdwg.mxu0
    %v171 = vmul.f32 %v168, 0.01
    %v172 = vmax.f32 %v168, %v171
    %v173 = vld [vmem:[#allocation5] sm:$0xff]
    %v174 = vld [vmem:[#allocation5 + $0x8] sm:$0xff]
    %v175 = vld [vmem:[#allocation5 + $0x10] sm:$0xff]
    %v176 = vld [vmem:[#allocation5 + $0x18] sm:$0xff]
    %v177 = vld [vmem:[#allocation5 + $0x20] sm:$0xff]
    %v178 = vld [vmem:[#allocation5 + $0x28] sm:$0xff]
    %v179 = vld [vmem:[#allocation5 + $0x30] sm:$0xff]
    %v180 = vld [vmem:[#allocation5 + $0x38] sm:$0xff]
    %v181 = vld [vmem:[#allocation5 + $0x40] sm:$0xff]
    %v182 = vld [vmem:[#allocation5 + $0x48] sm:$0xff]
    %v183 = vld [vmem:[#allocation5 + $0x50] sm:$0xff]
    %v184 = vld [vmem:[#allocation5 + $0x58] sm:$0xff]
    %v185 = vld [vmem:[#allocation5 + $0x60] sm:$0xff]
    %v186 = vld [vmem:[#allocation5 + $0x68] sm:$0xff]
    %v187 = vld [vmem:[#allocation5 + $0x70] sm:$0xff]
    %v188 = vld [vmem:[#allocation5 + $0x78] sm:$0xff]
    %v189 = vlaneseq
    %v190 = vshrl.u32 %v189, 7
    %v191 = vsub.s32 1, %v190
    %v192 = vrot.slane %v79, %v191
    %193 = vmatprep.subr.mxu0 0.0
    %194 = vmatpush1.msra.mxu0 %v188
    %195 = vmatprep.subr.mxu0 0.0
    %196 = vmatpush1.msra.mxu0 %v187
    %197 = vmatprep.subr.mxu0 0.0
    %198 = vmatpush1.msra.mxu0 %v186
    %199 = vmatprep.subr.mxu0 0.0
    %200 = vmatpush1.msra.mxu0 %v185
    %201 = vmatprep.subr.mxu0 0.0
    %202 = vmatpush1.msra.mxu0 %v184
    %203 = vmatprep.subr.mxu0 0.0
    %204 = vmatpush1.msra.mxu0 %v183
    %205 = vmatprep.subr.mxu0 0.0
    %206 = vmatpush1.msra.mxu0 %v182
    %207 = vmatprep.subr.mxu0 0.0
    %208 = vmatpush1.msra.mxu0 %v181
    %209 = vmatprep.subr.mxu0 0.0
    %210 = vmatpush1.msra.mxu0 %v180
    %211 = vmatprep.subr.mxu0 0.0
    %212 = vmatpush1.msra.mxu0 %v179
    %213 = vmatprep.subr.mxu0 0.0
    %214 = vmatpush1.msra.mxu0 %v178
    %215 = vmatprep.subr.mxu0 0.0
    %216 = vmatpush1.msra.mxu0 %v177
    %217 = vmatprep.subr.mxu0 0.0
    %218 = vmatpush1.msra.mxu0 %v176
    %219 = vmatprep.subr.mxu0 0.0
    %220 = vmatpush1.msra.mxu0 %v175
    %221 = vmatprep.subr.mxu0 0.0
    %222 = vmatpush1.msra.mxu0 %v174
    %223 = vmatprep.subr.mxu0 0.0
    %224 = vmatpush1.msra.mxu0 %v173
    %225 = vmatprep.subr.mxu0 0.0
    %226 = vmatpush2.msra.mxu0 0.0
    %227 = vmatprep.subr.mxu0 0.0
    %228 = vmatpush2.msra.mxu0 0.0
    %229 = vmatprep.subr.mxu0 0.0
    %230 = vmatpush2.msra.mxu0 0.0
    %231 = vmatprep.subr.mxu0 0.0
    %232 = vmatpush2.msra.mxu0 0.0
    %233 = vmatprep.subr.mxu0 0.0
    %234 = vmatpush2.msra.mxu0 0.0
    %235 = vmatprep.subr.mxu0 0.0
    %236 = vmatpush2.msra.mxu0 0.0
    %237 = vmatprep.subr.mxu0 0.0
    %238 = vmatpush2.msra.mxu0 0.0
    %239 = vmatprep.subr.mxu0 0.0
    %240 = vmatpush2.msra.mxu0 0.0
    %241 = vmatprep.subr.mxu0 0.0
    %242 = vmatpush2.msra.mxu0 0.0
    %243 = vmatprep.subr.mxu0 0.0
    %244 = vmatpush2.msra.mxu0 0.0
    %245 = vmatprep.subr.mxu0 0.0
    %246 = vmatpush2.msra.mxu0 0.0
    %247 = vmatprep.subr.mxu0 0.0
    %248 = vmatpush2.msra.mxu0 0.0
    %249 = vmatprep.subr.mxu0 0.0
    %250 = vmatpush2.msra.mxu0 0.0
    %251 = vmatprep.subr.mxu0 0.0
    %252 = vmatpush2.msra.mxu0 0.0
    %253 = vmatprep.subr.mxu0 0.0
    %254 = vmatpush2.msra.mxu0 0.0
    %255 = vmatprep.subr.mxu0 0.0
    %256 = vmatpush2.msra.mxu0 0.0
    %257 = vmatprep.mubr.f32.mxu0 0.0
    %258 = vmatmul.mubr.f32.gmra.mxu0 %v172
    %v259 = vpop.f32.mrf.mxu0
    %v260 = vadd.f32 %v192, %v259
    %v261 = vpop.f32.mrf.mxu0
    %262 = vdwg.mxu0
    %v263 = vmul.f32 %v260, 0.01
    %v264 = vmax.f32 %v260, %v263
    %v265 = vld [vmem:[#allocation7] sm:$0xff]
    %v266 = vld [vmem:[#allocation7 + $0x8] sm:$0xff]
    %v267 = vld [vmem:[#allocation7 + $0x10] sm:$0xff]
    %v268 = vld [vmem:[#allocation7 + $0x18] sm:$0xff]
    %v269 = vld [vmem:[#allocation7 + $0x20] sm:$0xff]
    %v270 = vld [vmem:[#allocation7 + $0x28] sm:$0xff]
    %v271 = vld [vmem:[#allocation7 + $0x30] sm:$0xff]
    %v272 = vld [vmem:[#allocation7 + $0x38] sm:$0xff]
    %v273 = vld [vmem:[#allocation7 + $0x40] sm:$0xff]
    %v274 = vld [vmem:[#allocation7 + $0x48] sm:$0xff]
    %v275 = vld [vmem:[#allocation7 + $0x50] sm:$0xff]
    %v276 = vld [vmem:[#allocation7 + $0x58] sm:$0xff]
    %v277 = vld [vmem:[#allocation7 + $0x60] sm:$0xff]
    %v278 = vld [vmem:[#allocation7 + $0x68] sm:$0xff]
    %v279 = vld [vmem:[#allocation7 + $0x70] sm:$0xff]
    %v280 = vld [vmem:[#allocation7 + $0x78] sm:$0xff]
    %v281 = vld [vmem:[#allocation7 + $0x80] sm:$0xff]
    %v282 = vld [vmem:[#allocation7 + $0x88] sm:$0xff]
    %v283 = vld [vmem:[#allocation7 + $0x90] sm:$0xff]
    %v284 = vld [vmem:[#allocation7 + $0x98] sm:$0xff]
    %v285 = vld [vmem:[#allocation7 + $0xa0] sm:$0xff]
    %v286 = vld [vmem:[#allocation7 + $0xa8] sm:$0xff]
    %v287 = vld [vmem:[#allocation7 + $0xb0] sm:$0xff]
    %v288 = vld [vmem:[#allocation7 + $0xb8] sm:$0xff]
    %v289 = vld [vmem:[#allocation7 + $0xc0] sm:$0xff]
    %v290 = vld [vmem:[#allocation7 + $0xc8] sm:$0xff]
    %v291 = vld [vmem:[#allocation7 + $0xd0] sm:$0xff]
    %v292 = vld [vmem:[#allocation7 + $0xd8] sm:$0xff]
    %v293 = vld [vmem:[#allocation7 + $0xe0] sm:$0xff]
    %v294 = vld [vmem:[#allocation7 + $0xe8] sm:$0xff]
    %v295 = vld [vmem:[#allocation7 + $0xf0] sm:$0xff]
    %v296 = vld [vmem:[#allocation7 + $0xf8] sm:$0xff]
    %v298 = vlaneseq
    %v299 = vshrl.u32 %v298, 7
    %v300 = vsub.s32 2, %v299
    %v301 = vrot.slane %v79, %v300
    %v302 = vlaneseq
    %v303 = vshrl.u32 %v302, 7
    %v304 = vsub.s32 6, %v303
    %v305 = vrot.slane %v79, %v304
    %v308 = vlaneseq
    %v309 = vshrl.u32 %v308, 7
    %v310 = vsub.s32 2, %v309
    %v311 = vrot.slane %v301, %v310
    %v312 = vlaneseq
    %v313 = vshrl.u32 %v312, 7
    %v314 = vsub.s32 2, %v313
    %v315 = vrot.slane %v305, %v314
    %316 = vmatprep.subr.mxu0 %v296
    %317 = vmatpush1.msra.mxu0 %v295
    %318 = vmatprep.subr.mxu0 %v294
    %319 = vmatpush1.msra.mxu0 %v293
    %320 = vmatprep.subr.mxu0 %v292
    %321 = vmatpush1.msra.mxu0 %v291
    %322 = vmatprep.subr.mxu0 %v290
    %323 = vmatpush1.msra.mxu0 %v289
    %324 = vmatprep.subr.mxu0 %v288
    %325 = vmatpush1.msra.mxu0 %v287
    %326 = vmatprep.subr.mxu0 %v286
    %327 = vmatpush1.msra.mxu0 %v285
    %328 = vmatprep.subr.mxu0 %v284
    %329 = vmatpush1.msra.mxu0 %v283
    %330 = vmatprep.subr.mxu0 %v282
    %331 = vmatpush1.msra.mxu0 %v281
    %332 = vmatprep.subr.mxu0 %v280
    %333 = vmatpush1.msra.mxu0 %v279
    %334 = vmatprep.subr.mxu0 %v278
    %335 = vmatpush1.msra.mxu0 %v277
    %336 = vmatprep.subr.mxu0 %v276
    %337 = vmatpush1.msra.mxu0 %v275
    %338 = vmatprep.subr.mxu0 %v274
    %339 = vmatpush1.msra.mxu0 %v273
    %340 = vmatprep.subr.mxu0 %v272
    %341 = vmatpush1.msra.mxu0 %v271
    %342 = vmatprep.subr.mxu0 %v270
    %343 = vmatpush1.msra.mxu0 %v269
    %344 = vmatprep.subr.mxu0 %v268
    %345 = vmatpush1.msra.mxu0 %v267
    %346 = vmatprep.subr.mxu0 %v266
    %347 = vmatpush1.msra.mxu0 %v265
    %348 = vmatprep.subr.mxu0 0.0
    %349 = vmatpush2.msra.mxu0 0.0
    %350 = vmatprep.subr.mxu0 0.0
    %351 = vmatpush2.msra.mxu0 0.0
    %352 = vmatprep.subr.mxu0 0.0
    %353 = vmatpush2.msra.mxu0 0.0
    %354 = vmatprep.subr.mxu0 0.0
    %355 = vmatpush2.msra.mxu0 0.0
    %356 = vmatprep.subr.mxu0 0.0
    %357 = vmatpush2.msra.mxu0 0.0
    %358 = vmatprep.subr.mxu0 0.0
    %359 = vmatpush2.msra.mxu0 0.0
    %360 = vmatprep.subr.mxu0 0.0
    %361 = vmatpush2.msra.mxu0 0.0
    %362 = vmatprep.subr.mxu0 0.0
    %363 = vmatpush2.msra.mxu0 0.0
    %364 = vmatprep.subr.mxu0 0.0
    %365 = vmatpush2.msra.mxu0 0.0
    %366 = vmatprep.subr.mxu0 0.0
    %367 = vmatpush2.msra.mxu0 0.0
    %368 = vmatprep.subr.mxu0 0.0
    %369 = vmatpush2.msra.mxu0 0.0
    %370 = vmatprep.subr.mxu0 0.0
    %371 = vmatpush2.msra.mxu0 0.0
    %372 = vmatprep.subr.mxu0 0.0
    %373 = vmatpush2.msra.mxu0 0.0
    %374 = vmatprep.subr.mxu0 0.0
    %375 = vmatpush2.msra.mxu0 0.0
    %376 = vmatprep.subr.mxu0 0.0
    %377 = vmatpush2.msra.mxu0 0.0
    %378 = vmatprep.subr.mxu0 0.0
    %379 = vmatpush2.msra.mxu0 0.0
    %380 = vmatprep.mubr.f32.mxu0 0.0
    %381 = vmatmul.mubr.f32.gmra.mxu0 %v264
    %v382 = vpop.f32.mrf.mxu0
    %v383 = vadd.f32 %v311, %v382
    %v384 = vpop.f32.mrf.mxu0
    %v385 = vadd.f32 %v315, %v384
    %386 = vdwg.mxu0
    %v387 = vmul.f32 %v383, 0.01
    %v388 = vmul.f32 %v385, 0.01
    %v389 = vmax.f32 %v383, %v387
    %v390 = vmax.f32 %v385, %v388
    %v391 = vld [vmem:[#allocation8] sm:$0xff]
    %v392 = vld [vmem:[#allocation8 + $0x8] sm:$0xff]
    %v393 = vld [vmem:[#allocation8 + $0x10] sm:$0xff]
    %v394 = vld [vmem:[#allocation8 + $0x18] sm:$0xff]
    %v395 = vld [vmem:[#allocation8 + $0x20] sm:$0xff]
    %v396 = vld [vmem:[#allocation8 + $0x28] sm:$0xff]
    %v397 = vld [vmem:[#allocation8 + $0x30] sm:$0xff]
    %v398 = vld [vmem:[#allocation8 + $0x38] sm:$0xff]
    %v399 = vld [vmem:[#allocation8 + $0x40] sm:$0xff]
    %v400 = vld [vmem:[#allocation8 + $0x48] sm:$0xff]
    %v401 = vld [vmem:[#allocation8 + $0x50] sm:$0xff]
    %v402 = vld [vmem:[#allocation8 + $0x58] sm:$0xff]
    %v403 = vld [vmem:[#allocation8 + $0x60] sm:$0xff]
    %v404 = vld [vmem:[#allocation8 + $0x68] sm:$0xff]
    %v405 = vld [vmem:[#allocation8 + $0x70] sm:$0xff]
    %v406 = vld [vmem:[#allocation8 + $0x78] sm:$0xff]
    %v407 = vld [vmem:[#allocation8 + $0x80] sm:$0xff]
    %v408 = vld [vmem:[#allocation8 + $0x88] sm:$0xff]
    %v409 = vld [vmem:[#allocation8 + $0x90] sm:$0xff]
    %v410 = vld [vmem:[#allocation8 + $0x98] sm:$0xff]
    %v411 = vld [vmem:[#allocation8 + $0xa0] sm:$0xff]
    %v412 = vld [vmem:[#allocation8 + $0xa8] sm:$0xff]
    %v413 = vld [vmem:[#allocation8 + $0xb0] sm:$0xff]
    %v414 = vld [vmem:[#allocation8 + $0xb8] sm:$0xff]
    %v415 = vld [vmem:[#allocation8 + $0xc0] sm:$0xff]
    %v416 = vld [vmem:[#allocation8 + $0xc8] sm:$0xff]
    %v417 = vld [vmem:[#allocation8 + $0xd0] sm:$0xff]
    %v418 = vld [vmem:[#allocation8 + $0xd8] sm:$0xff]
    %v419 = vld [vmem:[#allocation8 + $0xe0] sm:$0xff]
    %v420 = vld [vmem:[#allocation8 + $0xe8] sm:$0xff]
    %v421 = vld [vmem:[#allocation8 + $0xf0] sm:$0xff]
    %v422 = vld [vmem:[#allocation8 + $0xf8] sm:$0xff]
    %v423 = vlaneseq
    %v424 = vshrl.u32 %v423, 7
    %v425 = vsub.s32 3, %v424
    %v426 = vrot.slane %v79, %v425
    %427 = vmatprep.subr.mxu0 0.0
    %428 = vmatpush1.msra.mxu0 %v406
    %429 = vmatprep.subr.mxu0 0.0
    %430 = vmatpush1.msra.mxu0 %v405
    %431 = vmatprep.subr.mxu0 0.0
    %432 = vmatpush1.msra.mxu0 %v404
    %433 = vmatprep.subr.mxu0 0.0
    %434 = vmatpush1.msra.mxu0 %v403
    %435 = vmatprep.subr.mxu0 0.0
    %436 = vmatpush1.msra.mxu0 %v402
    %437 = vmatprep.subr.mxu0 0.0
    %438 = vmatpush1.msra.mxu0 %v401
    %439 = vmatprep.subr.mxu0 0.0
    %440 = vmatpush1.msra.mxu0 %v400
    %441 = vmatprep.subr.mxu0 0.0
    %442 = vmatpush1.msra.mxu0 %v399
    %443 = vmatprep.subr.mxu0 0.0
    %444 = vmatpush1.msra.mxu0 %v398
    %445 = vmatprep.subr.mxu0 0.0
    %446 = vmatpush1.msra.mxu0 %v397
    %447 = vmatprep.subr.mxu0 0.0
    %448 = vmatpush1.msra.mxu0 %v396
    %449 = vmatprep.subr.mxu0 0.0
    %450 = vmatpush1.msra.mxu0 %v395
    %451 = vmatprep.subr.mxu0 0.0
    %452 = vmatpush1.msra.mxu0 %v394
    %453 = vmatprep.subr.mxu0 0.0
    %454 = vmatpush1.msra.mxu0 %v393
    %455 = vmatprep.subr.mxu0 0.0
    %456 = vmatpush1.msra.mxu0 %v392
    %457 = vmatprep.subr.mxu0 0.0
    %458 = vmatpush1.msra.mxu0 %v391
    %459 = vmatprep.subr.mxu0 0.0
    %460 = vmatpush2.msra.mxu0 %v422
    %461 = vmatprep.subr.mxu0 0.0
    %462 = vmatpush2.msra.mxu0 %v421
    %463 = vmatprep.subr.mxu0 0.0
    %464 = vmatpush2.msra.mxu0 %v420
    %465 = vmatprep.subr.mxu0 0.0
    %466 = vmatpush2.msra.mxu0 %v419
    %467 = vmatprep.subr.mxu0 0.0
    %468 = vmatpush2.msra.mxu0 %v418
    %469 = vmatprep.subr.mxu0 0.0
    %470 = vmatpush2.msra.mxu0 %v417
    %471 = vmatprep.subr.mxu0 0.0
    %472 = vmatpush2.msra.mxu0 %v416
    %473 = vmatprep.subr.mxu0 0.0
    %474 = vmatpush2.msra.mxu0 %v415
    %475 = vmatprep.subr.mxu0 0.0
    %476 = vmatpush2.msra.mxu0 %v414
    %477 = vmatprep.subr.mxu0 0.0
    %478 = vmatpush2.msra.mxu0 %v413
    %479 = vmatprep.subr.mxu0 0.0
    %480 = vmatpush2.msra.mxu0 %v412
    %481 = vmatprep.subr.mxu0 0.0
    %482 = vmatpush2.msra.mxu0 %v411
    %483 = vmatprep.subr.mxu0 0.0
    %484 = vmatpush2.msra.mxu0 %v410
    %485 = vmatprep.subr.mxu0 0.0
    %486 = vmatpush2.msra.mxu0 %v409
    %487 = vmatprep.subr.mxu0 0.0
    %488 = vmatpush2.msra.mxu0 %v408
    %489 = vmatprep.subr.mxu0 0.0
    %490 = vmatpush2.msra.mxu0 %v407
    %491 = vmatprep.mubr.f32.mxu0 %v390
    %492 = vmatmul.mubr.f32.gmra.mxu0 %v389
    %v493 = vpop.f32.mrf.mxu0
    %v494 = vadd.f32 %v426, %v493
    %v495 = vpop.f32.mrf.mxu0
    %496 = vdwg.mxu0
    %497 = vst [vmem:[#allocation10] sm:$0xff] %v494
    // Predicated region
    $region42: #{_forward.1} parent=1 // pred_check
      _
    $region43: #{_forward.1} parent=1 // pred_check_branch
      %499 = sbr.rel (0) target = $region45
    $region44: #{_forward.1} parent=1 // pred_region
      %s501 = ssub.s32 128, 128
      %502 = vsyncadd [#allocation4], %s501
      %s504 = sshll.u32 [#allocation10], 4
      %s505 = int_to_ptr.vmem [resolvable:$true] %s504
      %507 = dma.vmem_to_hbm [thread:$0]  %s505, 128, %s6, [#allocation4]
    $region45: #{_forward.1} parent=1 // pred_fallthru
      _
    // Predicated region
    $region46: #{_forward.1} parent=1 // pred_check
      _
    $region47: #{_forward.1} parent=1 // pred_check_branch
      %509 = sbr.rel (0) target = $region49
    $region48: #{_forward.1} parent=1 // pred_region
      %510 = dma.done [#allocation4], 128
    $region49: #{_forward.1} parent=1 // pred_fallthru
      _
    %511 = vsyncpa [#allocation3], 1
    %512 = vsyncpa [#allocation6], 1
    %513 = vsyncpa [#allocation9], 1
    %514 = vsyncpa [#allocation4], 1

</llo_original>
